<compile_context>
chip_gen: v7x
topology: tpu7x:2x2x1
jax: 0.10.0
libtpu: 0.0.40
codegen_flags: <defaults>
</compile_context>

<pallas_src>
import jax
import jax.numpy as jnp
from jax.experimental import pallas as pl
from jax.experimental.pallas import tpu as pltpu

IN_F, H, OUT_F = 17, 256, 1


def _round_up(x, m):
    return ((x + m - 1) // m) * m


def mlp_kernel(x_ref, w1_ref, b1_ref, w2_ref, b2_ref, w3_ref, b3_ref, o_ref):
    # x, w1, w2 arrive as bf16; accumulate on the MXU in f32.
    x = x_ref[...]                                                      # (tb, 17) bf16
    h1 = jnp.dot(x, w1_ref[...], preferred_element_type=jnp.float32)    # (tb, 256) f32
    h1 = jnp.maximum(h1 + b1_ref[...], 0.0)                             # bias/ReLU in f32
    # dropout (eval mode) = identity

    h2 = jnp.dot(h1.astype(jnp.bfloat16), w2_ref[...],
                 preferred_element_type=jnp.float32)                    # (tb, 256) f32
    h2 = jnp.maximum(h2 + b2_ref[...], 0.0)
    # dropout (eval mode) = identity

    # fc3: 256 -> 1 done on the VPU/XLU (broadcast multiply + lane reduce) instead of
    # wasting a near-full MXU pass on a single output column.
    out = jnp.sum(h2 * w3_ref[...], axis=-1, keepdims=True) + b3_ref[...]  # (tb, 1) f32
    o_ref[...] = out.astype(o_ref.dtype)


def mlp_forward(x, params, *, tile_b=2048):
    """x: (B, 17) float32. params: dict of w1,b1,w2,b2,w3,b3 (f32, torch Linear shapes as
    (in, out) weights)."""
    B = x.shape[0]
    # Batch tile: large (2048) to amortize per-grid-step overhead; shrink for small B.
    tb = min(tile_b, _round_up(B, 8))
    Bp = _round_up(B, tb)
    if Bp != B:
        x = jnp.pad(x, ((0, Bp - B), (0, 0)))

    # MXU operands in bf16; epilogue params (biases, fc3 row) stay f32.
    xb = x.astype(jnp.bfloat16)
    w1 = params["w1"].astype(jnp.bfloat16)                  # (17, 256)
    w2 = params["w2"].astype(jnp.bfloat16)                  # (256, 256)
    b1 = params["b1"].reshape(1, H).astype(jnp.float32)     # (1, 256)
    b2 = params["b2"].reshape(1, H).astype(jnp.float32)     # (1, 256)
    w3 = params["w3"].reshape(1, H).astype(jnp.float32)     # (1, 256) row for VPU mul
    b3 = params["b3"].reshape(1, OUT_F).astype(jnp.float32) # (1, 1)

    grid = (Bp // tb,)

    # Weights/biases are tiny and grid-invariant: keep fully resident (block = full array).
    def wspec(shape):
        return pl.BlockSpec(shape, lambda i: (0, 0))

    out = pl.pallas_call(
        mlp_kernel,
        out_shape=jax.ShapeDtypeStruct((Bp, OUT_F), jnp.float32),
        grid_spec=pltpu.PrefetchScalarGridSpec(
            num_scalar_prefetch=0,
            grid=grid,
            in_specs=[
                pl.BlockSpec((tb, IN_F), lambda i: (i, 0)),   # x tile over batch
                wspec((IN_F, H)),
                wspec((1, H)),
                wspec((H, H)),
                wspec((1, H)),
                wspec((1, H)),
                wspec((1, OUT_F)),
            ],
            out_specs=pl.BlockSpec((tb, OUT_F), lambda i: (i, 0)),
        ),
        compiler_params=pltpu.CompilerParams(
            dimension_semantics=("parallel",),
            # Big batch tiles need more than v5e's 16 MiB scoped default; 48 MiB still
            # leaves headroom inside v7x's 64 MiB physical VMEM.
            vmem_limit_bytes=48 * 1024 * 1024,
        ),
    )(xb, w1, b1, w2, b2, w3, b3)

    return out[:B]


def init_params(key):
    """Deterministic init mirroring nn.Linear shapes (uniform +/- 1/sqrt(fan_in))."""
    k1, k2, k3, k4, k5, k6 = jax.random.split(key, 6)

    def u(k, shape, fan_in):
        bound = 1.0 / jnp.sqrt(fan_in)
        return jax.random.uniform(k, shape, jnp.float32, -bound, bound)

    return {
        "w1": u(k1, (IN_F, H), IN_F),
        "b1": u(k2, (H,), IN_F),
        "w2": u(k3, (H, H), H),
        "b2": u(k4, (H,), H),
        "w3": u(k5, (H, OUT_F), H),
        "b3": u(k6, (OUT_F,), H),
    }


if __name__ == "__main__":
    key = jax.random.PRNGKey(0)
    kp, kx = jax.random.split(key)
    params = init_params(kp)

    B = 8
    x = jax.random.normal(kx, (B, IN_F), dtype=jnp.float32)

    out = mlp_forward(x, params)
    out = jax.block_until_ready(out)
    assert out.shape == (B, OUT_F)

    # Reference mirroring the kernel's precision path (bf16 MXU operands, f32 accumulate,
    # eval-mode dropout = identity).
    xb = x.astype(jnp.bfloat16)
    h1 = jnp.maximum(
        jnp.dot(xb, params["w1"].astype(jnp.bfloat16),
                preferred_element_type=jnp.float32) + params["b1"], 0.0)
    h2 = jnp.maximum(
        jnp.dot(h1.astype(jnp.bfloat16), params["w2"].astype(jnp.bfloat16),
                preferred_element_type=jnp.float32) + params["b2"], 0.0)
    ref = jnp.sum(h2 * params["w3"].reshape(1, H), axis=-1, keepdims=True) + params["b3"]
    assert jnp.allclose(out, ref, atol=2e-3, rtol=2e-3), \
        f"max abs err {jnp.max(jnp.abs(out - ref))}"

    # Looser sanity check against the pure-f32 torch-equivalent forward.
    h1f = jnp.maximum(x @ params["w1"] + params["b1"], 0.0)
    h2f = jnp.maximum(h1f @ params["w2"] + params["b2"], 0.0)
    reff = h2f @ params["w3"] + params["b3"]
    assert jnp.allclose(out, reff, atol=5e-2, rtol=5e-2)

    print("KERNEL_OK")
</pallas_src>

<mosaic_0001>
module attributes {stable_mosaic.version = 11 : i64} {
  func.func @mlp_kernel(%arg0: i32, %arg1: memref<8x17xbf16, #tpu.memory_space<vmem>>, %arg2: memref<17x256xbf16, #tpu.memory_space<vmem>>, %arg3: memref<1x256xf32, #tpu.memory_space<vmem>>, %arg4: memref<256x256xbf16, #tpu.memory_space<vmem>>, %arg5: memref<1x256xf32, #tpu.memory_space<vmem>>, %arg6: memref<1x256xf32, #tpu.memory_space<vmem>>, %arg7: memref<1x1xf32, #tpu.memory_space<vmem>>, %arg8: memref<8x1xf32, #tpu.memory_space<vmem>>) attributes {dimension_semantics = [#tpu.dimension_semantics<parallel>], iteration_bounds = array<i64: 1>, scalar_prefetch = 0 : i64, scratch_operands = 0 : i64, tpu.core_type = #tpu.core_type<tc>, window_params = [{transform_indices = @transform_0, window_bounds = array<i64: 8, 17>}, {pipeline_mode = #tpu.pipeline_mode<synchronous>, transform_indices = @transform_1, window_bounds = array<i64: 17, 256>}, {pipeline_mode = #tpu.pipeline_mode<synchronous>, transform_indices = @transform_2, window_bounds = array<i64: 1, 256>}, {pipeline_mode = #tpu.pipeline_mode<synchronous>, transform_indices = @transform_3, window_bounds = array<i64: 256, 256>}, {pipeline_mode = #tpu.pipeline_mode<synchronous>, transform_indices = @transform_4, window_bounds = array<i64: 1, 256>}, {pipeline_mode = #tpu.pipeline_mode<synchronous>, transform_indices = @transform_5, window_bounds = array<i64: 1, 256>}, {pipeline_mode = #tpu.pipeline_mode<synchronous>, transform_indices = @transform_6, window_bounds = array<i64: 1, 1>}, {transform_indices = @transform_7, window_bounds = array<i64: 8, 1>}]} {
    %c0 = arith.constant 0 : index
    %c0_0 = arith.constant 0 : index
    %0 = vector.load %arg1[%c0, %c0_0] : memref<8x17xbf16, #tpu.memory_space<vmem>>, vector<8x17xbf16>
    %c0_1 = arith.constant 0 : index
    %c0_2 = arith.constant 0 : index
    %1 = vector.load %arg2[%c0_1, %c0_2] : memref<17x256xbf16, #tpu.memory_space<vmem>>, vector<17x256xbf16>
    %cst = arith.constant dense<0.000000e+00> : vector<8x256xf32>
    %2 = tpu.matmul %0, %1, %cst {dimension_numbers = #tpu.dot_dimension_numbers<[1], [0], [0], [1], [0, 0, 1, 1], [], []>} : vector<8x17xbf16>, vector<17x256xbf16>, vector<8x256xf32> -> vector<8x256xf32>
    %c0_3 = arith.constant 0 : index
    %c0_4 = arith.constant 0 : index
    %3 = vector.load %arg3[%c0_3, %c0_4] : memref<1x256xf32, #tpu.memory_space<vmem>>, vector<1x256xf32>
    %4 = vector.broadcast %3 : vector<1x256xf32> to vector<8x256xf32>
    %5 = arith.addf %2, %4 : vector<8x256xf32>
    %cst_5 = arith.constant 0.000000e+00 : f32
    %6 = vector.broadcast %cst_5 : f32 to vector<8x256xf32>
    %7 = arith.maximumf %5, %6 : vector<8x256xf32>
    %8 = arith.truncf %7 : vector<8x256xf32> to vector<8x256xbf16>
    %c0_6 = arith.constant 0 : index
    %c0_7 = arith.constant 0 : index
    %9 = vector.load %arg4[%c0_6, %c0_7] : memref<256x256xbf16, #tpu.memory_space<vmem>>, vector<256x256xbf16>
    %cst_8 = arith.constant dense<0.000000e+00> : vector<8x256xf32>
    %10 = tpu.matmul %8, %9, %cst_8 {dimension_numbers = #tpu.dot_dimension_numbers<[1], [0], [0], [1], [0, 0, 1, 1], [], []>} : vector<8x256xbf16>, vector<256x256xbf16>, vector<8x256xf32> -> vector<8x256xf32>
    %c0_9 = arith.constant 0 : index
    %c0_10 = arith.constant 0 : index
    %11 = vector.load %arg5[%c0_9, %c0_10] : memref<1x256xf32, #tpu.memory_space<vmem>>, vector<1x256xf32>
    %12 = vector.broadcast %11 : vector<1x256xf32> to vector<8x256xf32>
    %13 = arith.addf %10, %12 : vector<8x256xf32>
    %cst_11 = arith.constant 0.000000e+00 : f32
    %14 = vector.broadcast %cst_11 : f32 to vector<8x256xf32>
    %15 = arith.maximumf %13, %14 : vector<8x256xf32>
    %c0_12 = arith.constant 0 : index
    %c0_13 = arith.constant 0 : index
    %16 = vector.load %arg6[%c0_12, %c0_13] : memref<1x256xf32, #tpu.memory_space<vmem>>, vector<1x256xf32>
    %17 = vector.broadcast %16 : vector<1x256xf32> to vector<8x256xf32>
    %18 = arith.mulf %15, %17 : vector<8x256xf32>
    %cst_14 = arith.constant dense<0.000000e+00> : vector<8xf32>
    %19 = vector.multi_reduction <add>, %18, %cst_14 [1] : vector<8x256xf32> to vector<8xf32>
    %20 = vector.shape_cast %19 : vector<8xf32> to vector<8x1xf32>
    %c0_15 = arith.constant 0 : index
    %c0_16 = arith.constant 0 : index
    %21 = vector.load %arg7[%c0_15, %c0_16] : memref<1x1xf32, #tpu.memory_space<vmem>>, vector<1x1xf32>
    %22 = vector.broadcast %21 : vector<1x1xf32> to vector<8x1xf32>
    %23 = arith.addf %20, %22 : vector<8x1xf32>
    %c0_17 = arith.constant 0 : index
    %c0_18 = arith.constant 0 : index
    %24 = vector.load %arg8[%c0_17, %c0_18] : memref<8x1xf32, #tpu.memory_space<vmem>>, vector<8x1xf32>
    tpu.vector_store %arg8[%c0_17, %c0_18], %23 {strides = array<i32>} : memref<8x1xf32, #tpu.memory_space<vmem>>, vector<8x1xf32>,
    return
  }
  func.func @transform_0(%arg0: i32) -> (i32, i32) {
    %c0_i32 = arith.constant 0 : i32
    %c0_i32_0 = arith.constant 0 : i32
    return %arg0, %c0_i32 : i32, i32
  }
  func.func @transform_1(%arg0: i32) -> (i32, i32) {
    %c0_i32 = arith.constant 0 : i32
    %c0_i32_0 = arith.constant 0 : i32
    %c0_i32_1 = arith.constant 0 : i32
    return %c0_i32, %c0_i32_0 : i32, i32
  }
  func.func @transform_2(%arg0: i32) -> (i32, i32) {
    %c0_i32 = arith.constant 0 : i32
    %c0_i32_0 = arith.constant 0 : i32
    %c0_i32_1 = arith.constant 0 : i32
    return %c0_i32, %c0_i32_0 : i32, i32
  }
  func.func @transform_3(%arg0: i32) -> (i32, i32) {
    %c0_i32 = arith.constant 0 : i32
    %c0_i32_0 = arith.constant 0 : i32
    %c0_i32_1 = arith.constant 0 : i32
    return %c0_i32, %c0_i32_0 : i32, i32
  }
  func.func @transform_4(%arg0: i32) -> (i32, i32) {
    %c0_i32 = arith.constant 0 : i32
    %c0_i32_0 = arith.constant 0 : i32
    %c0_i32_1 = arith.constant 0 : i32
    return %c0_i32, %c0_i32_0 : i32, i32
  }
  func.func @transform_5(%arg0: i32) -> (i32, i32) {
    %c0_i32 = arith.constant 0 : i32
    %c0_i32_0 = arith.constant 0 : i32
    %c0_i32_1 = arith.constant 0 : i32
    return %c0_i32, %c0_i32_0 : i32, i32
  }
  func.func @transform_6(%arg0: i32) -> (i32, i32) {
    %c0_i32 = arith.constant 0 : i32
    %c0_i32_0 = arith.constant 0 : i32
    %c0_i32_1 = arith.constant 0 : i32
    return %c0_i32, %c0_i32_0 : i32, i32
  }
  func.func @transform_7(%arg0: i32) -> (i32, i32) {
    %c0_i32 = arith.constant 0 : i32
    %c0_i32_0 = arith.constant 0 : i32
    return %arg0, %c0_i32 : i32, i32
  }
}

</mosaic_0001>

<llo_original>
// kernel: tpu_custom_call.1
$region0: #{tpu_custom_call.1}
  #allocation0 [shape = 'u32[]', space=smem, size = 0x4, offset = 0x4, fixed_abs, tag = 'smem constant byte address 0x4 - core index']
  #allocation1 [shape = 'u32[144,128]{1,0:T(1,128)}', space=vmem, size = 0x12000, scoped, tag = 'internal scratch']
  #allocation2 [shape = 'f32[1,1]{1,0:T(1,128)S(1)}', space=vmem, size = 0x200, scoped, tag = 'scoped memory for tpu_custom_call.1']
  %s0 = inlined_call_operand.hbm [shape: bf16[8,17], index: 0, kind: input, shape index: {}]
  %s1 = inlined_call_operand.hbm [shape: bf16[17,256], index: 1, kind: input, shape index: {}]
  %s2 = inlined_call_operand.vmem [shape: f32[1,256], index: 2, kind: input, shape index: {}]
  %s3 = inlined_call_operand.hbm [shape: bf16[256,256], index: 3, kind: input, shape index: {}]
  %s4 = inlined_call_operand.vmem [shape: f32[1,256], index: 4, kind: input, shape index: {}]
  %s5 = inlined_call_operand.vmem [shape: f32[1,256], index: 5, kind: input, shape index: {}]
  %s6 = inlined_call_operand.<no memory space> [shape: f32[1,1], index: 6, kind: input, shape index: {}]
  %s7 = inlined_call_operand.vmem [shape: f32[8,1], index: 7, kind: output, shape index: {}]
  %s8 = sld [smem:[#allocation0]]
  $region50: #{tpu_custom_call.1} parent=0
    _
  %s10 = ssub.s32 1, %s8
  %s11 = scalar_select 0, %s10, %s8
  %v12 = vstv %s6
  %13 = vst [vmem:[#allocation2] sm:$0x1] %v12
  $region1: #{tpu_custom_call.1} parent=0
    #allocation3 [shape = 'u8[2048]{0}', space=vmem, size = 0x800, scoped, tag = 'input window, operand 0, single buffered']
    #allocation4 [shape = 's32[1]{0}', space=sflag, size = 0x4, scoped, tag = 'scoped memory for tpu_custom_call.1']
    #allocation5 [shape = 'u8[12288]{0}', space=vmem, size = 0x3000, scoped, tag = 'input window, operand 1, single buffered']
    #allocation6 [shape = 's32[1]{0}', space=sflag, size = 0x4, scoped, tag = 'scoped memory for tpu_custom_call.1']
    #allocation7 [shape = 'u8[131072]{0}', space=vmem, size = 0x20000, scoped, tag = 'input window, operand 3, single buffered']
    %14 = vsyncpa [#allocation4], 0
    %15 = vsyncpa [#allocation6], 0
    // Predicated region
    $region2: #{tpu_custom_call.1} parent=1 // pred_check
      _
    $region3: #{tpu_custom_call.1} parent=1 // pred_check_branch
      %17 = sbr.rel (0) target = $region5
    $region4: #{tpu_custom_call.1} parent=1 // pred_region
      %s19 = ssub.s32 64, 64
      %20 = vsyncadd [#allocation4], %s19
      %s22 = sshll.u32 [#allocation3], 4
      %s23 = int_to_ptr.vmem [resolvable:$true] %s22
      %25 = dma.hbm_to_vmem [thread:$0]  %s0, 64, %s23, [#allocation4]
    $region5: #{tpu_custom_call.1} parent=1 // pred_fallthru
      _
    // Predicated region
    $region6: #{tpu_custom_call.1} parent=1 // pred_check
      _
    $region7: #{tpu_custom_call.1} parent=1 // pred_check_branch
      %27 = sbr.rel (0) target = $region9
    $region8: #{tpu_custom_call.1} parent=1 // pred_region
      %s29 = ssub.s32 384, 384
      %30 = vsyncadd [#allocation6], %s29
      %s31 = sshll.u32 [#allocation5], 4
      %s32 = int_to_ptr.vmem [resolvable:$true] %s31
      %37 = dma.hbm_to_vmem [thread:$0]  %s1, 384, %s32, [#allocation6], 128, 128, 8
    $region9: #{tpu_custom_call.1} parent=1 // pred_fallthru
      _
    // Predicated region
    $region10: #{tpu_custom_call.1} parent=1 // pred_check
      _
    $region11: #{tpu_custom_call.1} parent=1 // pred_check_branch
      %39 = sbr.rel (0) target = $region13
    $region12: #{tpu_custom_call.1} parent=1 // pred_region
      _
    $region13: #{tpu_custom_call.1} parent=1 // pred_fallthru
      _
    // Predicated region
    $region14: #{tpu_custom_call.1} parent=1 // pred_check
      _
    $region15: #{tpu_custom_call.1} parent=1 // pred_check_branch
      %41 = sbr.rel (0) target = $region17
    $region16: #{tpu_custom_call.1} parent=1 // pred_region
      %s43 = ssub.s32 4096, 4096
      %44 = vsyncadd [#allocation6], %s43
      %s45 = sshll.u32 [#allocation7], 4
      %s46 = int_to_ptr.vmem [resolvable:$true] %s45
      %51 = dma.hbm_to_vmem [thread:$0]  %s3, 4096, %s46, [#allocation6], 128, 128, 8
    $region17: #{tpu_custom_call.1} parent=1 // pred_fallthru
      _
    // Predicated region
    $region18: #{tpu_custom_call.1} parent=1 // pred_check
      _
    $region19: #{tpu_custom_call.1} parent=1 // pred_check_branch
      %53 = sbr.rel (0) target = $region21
    $region20: #{tpu_custom_call.1} parent=1 // pred_region
      _
    $region21: #{tpu_custom_call.1} parent=1 // pred_fallthru
      _
    // Predicated region
    $region22: #{tpu_custom_call.1} parent=1 // pred_check
      _
    $region23: #{tpu_custom_call.1} parent=1 // pred_check_branch
      %55 = sbr.rel (0) target = $region25
    $region24: #{tpu_custom_call.1} parent=1 // pred_region
      _
    $region25: #{tpu_custom_call.1} parent=1 // pred_fallthru
      _
    // Predicated region
    $region26: #{tpu_custom_call.1} parent=1 // pred_check
      _
    $region27: #{tpu_custom_call.1} parent=1 // pred_check_branch
      %57 = sbr.rel (0) target = $region29
    $region28: #{tpu_custom_call.1} parent=1 // pred_region
      _
    $region29: #{tpu_custom_call.1} parent=1 // pred_fallthru
      _
    // Predicated region
    $region30: #{tpu_custom_call.1} parent=1 // pred_check
      _
    $region31: #{tpu_custom_call.1} parent=1 // pred_check_branch
      %59 = sbr.rel (0) target = $region33
    $region32: #{tpu_custom_call.1} parent=1 // pred_region
      %60 = dma.done [#allocation4], 64
    $region33: #{tpu_custom_call.1} parent=1 // pred_fallthru
      _
    // Predicated region
    $region34: #{tpu_custom_call.1} parent=1 // pred_check
      _
    $region35: #{tpu_custom_call.1} parent=1 // pred_check_branch
      %62 = sbr.rel (0) target = $region37
    $region36: #{tpu_custom_call.1} parent=1 // pred_region
      %63 = dma.done [#allocation6], 384
    $region37: #{tpu_custom_call.1} parent=1 // pred_fallthru
      _
    // Predicated region
    $region38: #{tpu_custom_call.1} parent=1 // pred_check
      _
    $region39: #{tpu_custom_call.1} parent=1 // pred_check_branch
      %65 = sbr.rel (0) target = $region41
    $region40: #{tpu_custom_call.1} parent=1 // pred_region
      %66 = dma.done [#allocation6], 4096
    $region41: #{tpu_custom_call.1} parent=1 // pred_fallthru
      _
    %v68 = vld [vmem:[#allocation3] sm:$0xf]
    %v69 = vld [vmem:[#allocation5] sm:$0xff]
    %v70 = vld [vmem:[#allocation5 + $0x8] sm:$0xff]
    %v71 = vld [vmem:[#allocation5 + $0x10] sm:$0x11]
    %v72 = vld [vmem:[%s2] sm:$0x3]
    %v74 = vlaneseq
    %v75 = vshrl.u32 %v74, 7
    %v76 = vsub.s32 0, %v75
    %v77 = vrot.slane %v72, %v76
    %v78 = vlaneseq
    %v79 = vshrl.u32 %v78, 7
    %v80 = vsub.s32 1, %v79
    %v81 = vrot.slane %v72, %v80
    %v87 = vunpack.c.l.b16 %v69
    %v88 = vunpack.c.h.b16 %v69
    %v89 = vunpack.c.l.b16 %v70
    %v90 = vunpack.c.h.b16 %v70
    %v91 = vunpack.c.l.b16 %v71
    %v92 = vunpack.c.h.b16 %v71
    %v93 = vpack.c.b16 %v89, %v87
    %v94 = vpack.c.b16 %v90, %v88
    %v95 = vpack.c.b16 %v91, %v91
    %v96 = vpack.c.b16 %v92, %v92
    %vm99 = vcmask 138240
    %v101 = vsel %vm99, %v68, 0
    %vm103 = vcmask 1040384
    %v104 = vsel 0, 4294967295, 65535
    %v105 = vsel %vm103, %v104, 0
    %v107 = vand.u32 %v95, %v105
    %v110 = vand.u32 %v96, %v105
    %112 = vmatprep.subr.bf16.mxu0 %v94
    %113 = vmatpush1.bf16.msra.mxu0 %v93
    %114 = vmatprep.subr.bf16.mxu0 %v110
    %115 = vmatpush1.bf16.msra.mxu0 %v107
    %116 = vmatprep.subr.bf16.mxu0 0
    %117 = vmatpush1.bf16.msra.mxu0 0
    %118 = vmatprep.subr.bf16.mxu0 0
    %119 = vmatpush1.bf16.msra.mxu0 0
    %120 = vmatprep.subr.bf16.mxu0 0
    %121 = vmatpush1.bf16.msra.mxu0 0
    %122 = vmatprep.subr.bf16.mxu0 0
    %123 = vmatpush1.bf16.msra.mxu0 0
    %124 = vmatprep.subr.bf16.mxu0 0
    %125 = vmatpush1.bf16.msra.mxu0 0
    %126 = vmatprep.subr.bf16.mxu0 0
    %127 = vmatpush1.bf16.msra.mxu0 0
    %128 = vmatprep.subr.bf16.mxu0 0
    %129 = vmatpush1.bf16.msra.mxu0 0
    %130 = vmatprep.subr.bf16.mxu0 0
    %131 = vmatpush1.bf16.msra.mxu0 0
    %132 = vmatprep.subr.bf16.mxu0 0
    %133 = vmatpush1.bf16.msra.mxu0 0
    %134 = vmatprep.subr.bf16.mxu0 0
    %135 = vmatpush1.bf16.msra.mxu0 0
    %136 = vmatprep.subr.bf16.mxu0 0
    %137 = vmatpush1.bf16.msra.mxu0 0
    %138 = vmatprep.subr.bf16.mxu0 0
    %139 = vmatpush1.bf16.msra.mxu0 0
    %140 = vmatprep.subr.bf16.mxu0 0
    %141 = vmatpush1.bf16.msra.mxu0 0
    %142 = vmatprep.subr.bf16.mxu0 0
    %143 = vmatpush1.bf16.msra.mxu0 0
    %144 = vmatprep.mubr.bf16.mxu0 0
    %145 = vmatmul.mubr.bf16.gmra.mrb[0].mxu0 %v101
    %v146 = vpop.f32.mrb[0].mxu0
    %v147 = vadd.f32 %v77, %v146
    %v148 = vpop.f32.mrb[0].mxu0
    %v149 = vadd.f32 %v81, %v148
    %v150 = vpop.f32.mrb[0].mxu0
    %v151 = vpop.f32.mrb[0].mxu0
    %152 = vdwg.mxu0
    %v153 = vmax.f32 %v147, 0.0
    %v154 = vmax.f32 %v149, 0.0
    %v155 = vpack.c.bf16 %v153, %v153
    %v156 = vpack.c.bf16 %v154, %v154
    %v157 = vld [vmem:[#allocation7] sm:$0xff]
    %v158 = vld [vmem:[#allocation7 + $0x8] sm:$0xff]
    %v159 = vld [vmem:[#allocation7 + $0x10] sm:$0xff]
    %v160 = vld [vmem:[#allocation7 + $0x18] sm:$0xff]
    %v161 = vld [vmem:[#allocation7 + $0x20] sm:$0xff]
    %v162 = vld [vmem:[#allocation7 + $0x28] sm:$0xff]
    %v163 = vld [vmem:[#allocation7 + $0x30] sm:$0xff]
    %v164 = vld [vmem:[#allocation7 + $0x38] sm:$0xff]
    %v165 = vld [vmem:[#allocation7 + $0x40] sm:$0xff]
    %v166 = vld [vmem:[#allocation7 + $0x48] sm:$0xff]
    %v167 = vld [vmem:[#allocation7 + $0x50] sm:$0xff]
    %v168 = vld [vmem:[#allocation7 + $0x58] sm:$0xff]
    %v169 = vld [vmem:[#allocation7 + $0x60] sm:$0xff]
    %v170 = vld [vmem:[#allocation7 + $0x68] sm:$0xff]
    %v171 = vld [vmem:[#allocation7 + $0x70] sm:$0xff]
    %v172 = vld [vmem:[#allocation7 + $0x78] sm:$0xff]
    %v173 = vld [vmem:[#allocation7 + $0x80] sm:$0xff]
    %v174 = vld [vmem:[#allocation7 + $0x88] sm:$0xff]
    %v175 = vld [vmem:[#allocation7 + $0x90] sm:$0xff]
    %v176 = vld [vmem:[#allocation7 + $0x98] sm:$0xff]
    %v177 = vld [vmem:[#allocation7 + $0xa0] sm:$0xff]
    %v178 = vld [vmem:[#allocation7 + $0xa8] sm:$0xff]
    %v179 = vld [vmem:[#allocation7 + $0xb0] sm:$0xff]
    %v180 = vld [vmem:[#allocation7 + $0xb8] sm:$0xff]
    %v181 = vld [vmem:[#allocation7 + $0xc0] sm:$0xff]
    %v182 = vld [vmem:[#allocation7 + $0xc8] sm:$0xff]
    %v183 = vld [vmem:[#allocation7 + $0xd0] sm:$0xff]
    %v184 = vld [vmem:[#allocation7 + $0xd8] sm:$0xff]
    %v185 = vld [vmem:[#allocation7 + $0xe0] sm:$0xff]
    %v186 = vld [vmem:[#allocation7 + $0xe8] sm:$0xff]
    %v187 = vld [vmem:[#allocation7 + $0xf0] sm:$0xff]
    %v188 = vld [vmem:[#allocation7 + $0xf8] sm:$0xff]
    %v189 = vld [vmem:[%s4] sm:$0x3]
    %v191 = vlaneseq
    %v192 = vshrl.u32 %v191, 7
    %v193 = vsub.s32 0, %v192
    %v194 = vrot.slane %v189, %v193
    %v195 = vlaneseq
    %v196 = vshrl.u32 %v195, 7
    %v197 = vsub.s32 1, %v196
    %v198 = vrot.slane %v189, %v197
    %v233 = vunpack.c.l.b16 %v157
    %v234 = vunpack.c.h.b16 %v157
    %v235 = vunpack.c.l.b16 %v158
    %v236 = vunpack.c.h.b16 %v158
    %v237 = vunpack.c.l.b16 %v159
    %v238 = vunpack.c.h.b16 %v159
    %v239 = vunpack.c.l.b16 %v160
    %v240 = vunpack.c.h.b16 %v160
    %v241 = vunpack.c.l.b16 %v161
    %v242 = vunpack.c.h.b16 %v161
    %v243 = vunpack.c.l.b16 %v162
    %v244 = vunpack.c.h.b16 %v162
    %v245 = vunpack.c.l.b16 %v163
    %v246 = vunpack.c.h.b16 %v163
    %v247 = vunpack.c.l.b16 %v164
    %v248 = vunpack.c.h.b16 %v164
    %v249 = vunpack.c.l.b16 %v165
    %v250 = vunpack.c.h.b16 %v165
    %v251 = vunpack.c.l.b16 %v166
    %v252 = vunpack.c.h.b16 %v166
    %v253 = vunpack.c.l.b16 %v167
    %v254 = vunpack.c.h.b16 %v167
    %v255 = vunpack.c.l.b16 %v168
    %v256 = vunpack.c.h.b16 %v168
    %v257 = vunpack.c.l.b16 %v169
    %v258 = vunpack.c.h.b16 %v169
    %v259 = vunpack.c.l.b16 %v170
    %v260 = vunpack.c.h.b16 %v170
    %v261 = vunpack.c.l.b16 %v171
    %v262 = vunpack.c.h.b16 %v171
    %v263 = vunpack.c.l.b16 %v172
    %v264 = vunpack.c.h.b16 %v172
    %v265 = vunpack.c.l.b16 %v173
    %v266 = vunpack.c.h.b16 %v173
    %v267 = vunpack.c.l.b16 %v174
    %v268 = vunpack.c.h.b16 %v174
    %v269 = vunpack.c.l.b16 %v175
    %v270 = vunpack.c.h.b16 %v175
    %v271 = vunpack.c.l.b16 %v176
    %v272 = vunpack.c.h.b16 %v176
    %v273 = vunpack.c.l.b16 %v177
    %v274 = vunpack.c.h.b16 %v177
    %v275 = vunpack.c.l.b16 %v178
    %v276 = vunpack.c.h.b16 %v178
    %v277 = vunpack.c.l.b16 %v179
    %v278 = vunpack.c.h.b16 %v179
    %v279 = vunpack.c.l.b16 %v180
    %v280 = vunpack.c.h.b16 %v180
    %v281 = vunpack.c.l.b16 %v181
    %v282 = vunpack.c.h.b16 %v181
    %v283 = vunpack.c.l.b16 %v182
    %v284 = vunpack.c.h.b16 %v182
    %v285 = vunpack.c.l.b16 %v183
    %v286 = vunpack.c.h.b16 %v183
    %v287 = vunpack.c.l.b16 %v184
    %v288 = vunpack.c.h.b16 %v184
    %v289 = vunpack.c.l.b16 %v185
    %v290 = vunpack.c.h.b16 %v185
    %v291 = vunpack.c.l.b16 %v186
    %v292 = vunpack.c.h.b16 %v186
    %v293 = vunpack.c.l.b16 %v187
    %v294 = vunpack.c.h.b16 %v187
    %v295 = vunpack.c.l.b16 %v188
    %v296 = vunpack.c.h.b16 %v188
    %v297 = vpack.c.b16 %v235, %v233
    %v298 = vpack.c.b16 %v236, %v234
    %v299 = vpack.c.b16 %v239, %v237
    %v300 = vpack.c.b16 %v240, %v238
    %v301 = vpack.c.b16 %v243, %v241
    %v302 = vpack.c.b16 %v244, %v242
    %v303 = vpack.c.b16 %v247, %v245
    %v304 = vpack.c.b16 %v248, %v246
    %v305 = vpack.c.b16 %v251, %v249
    %v306 = vpack.c.b16 %v252, %v250
    %v307 = vpack.c.b16 %v255, %v253
    %v308 = vpack.c.b16 %v256, %v254
    %v309 = vpack.c.b16 %v259, %v257
    %v310 = vpack.c.b16 %v260, %v258
    %v311 = vpack.c.b16 %v263, %v261
    %v312 = vpack.c.b16 %v264, %v262
    %v313 = vpack.c.b16 %v267, %v265
    %v314 = vpack.c.b16 %v268, %v266
    %v315 = vpack.c.b16 %v271, %v269
    %v316 = vpack.c.b16 %v272, %v270
    %v317 = vpack.c.b16 %v275, %v273
    %v318 = vpack.c.b16 %v276, %v274
    %v319 = vpack.c.b16 %v279, %v277
    %v320 = vpack.c.b16 %v280, %v278
    %v321 = vpack.c.b16 %v283, %v281
    %v322 = vpack.c.b16 %v284, %v282
    %v323 = vpack.c.b16 %v287, %v285
    %v324 = vpack.c.b16 %v288, %v286
    %v325 = vpack.c.b16 %v291, %v289
    %v326 = vpack.c.b16 %v292, %v290
    %v327 = vpack.c.b16 %v295, %v293
    %v328 = vpack.c.b16 %v296, %v294
    %361 = vmatprep.subr.bf16.mxu0 %v298
    %362 = vmatpush1.bf16.msra.mxu0 %v297
    %363 = vmatprep.subr.bf16.mxu0 %v300
    %364 = vmatpush1.bf16.msra.mxu0 %v299
    %365 = vmatprep.subr.bf16.mxu0 %v302
    %366 = vmatpush1.bf16.msra.mxu0 %v301
    %367 = vmatprep.subr.bf16.mxu0 %v304
    %368 = vmatpush1.bf16.msra.mxu0 %v303
    %369 = vmatprep.subr.bf16.mxu0 %v306
    %370 = vmatpush1.bf16.msra.mxu0 %v305
    %371 = vmatprep.subr.bf16.mxu0 %v308
    %372 = vmatpush1.bf16.msra.mxu0 %v307
    %373 = vmatprep.subr.bf16.mxu0 %v310
    %374 = vmatpush1.bf16.msra.mxu0 %v309
    %375 = vmatprep.subr.bf16.mxu0 %v312
    %376 = vmatpush1.bf16.msra.mxu0 %v311
    %377 = vmatprep.subr.bf16.mxu0 %v314
    %378 = vmatpush1.bf16.msra.mxu0 %v313
    %379 = vmatprep.subr.bf16.mxu0 %v316
    %380 = vmatpush1.bf16.msra.mxu0 %v315
    %381 = vmatprep.subr.bf16.mxu0 %v318
    %382 = vmatpush1.bf16.msra.mxu0 %v317
    %383 = vmatprep.subr.bf16.mxu0 %v320
    %384 = vmatpush1.bf16.msra.mxu0 %v319
    %385 = vmatprep.subr.bf16.mxu0 %v322
    %386 = vmatpush1.bf16.msra.mxu0 %v321
    %387 = vmatprep.subr.bf16.mxu0 %v324
    %388 = vmatpush1.bf16.msra.mxu0 %v323
    %389 = vmatprep.subr.bf16.mxu0 %v326
    %390 = vmatpush1.bf16.msra.mxu0 %v325
    %391 = vmatprep.subr.bf16.mxu0 %v328
    %392 = vmatpush1.bf16.msra.mxu0 %v327
    %393 = vmatprep.mubr.bf16.mxu0 %v156
    %394 = vmatmul.mubr.bf16.gmra.mrb[0].mxu0 %v155
    %v395 = vpop.f32.mrb[0].mxu0
    %v396 = vadd.f32 %v194, %v395
    %v397 = vpop.f32.mrb[0].mxu0
    %v398 = vadd.f32 %v198, %v397
    %v399 = vpop.f32.mrb[0].mxu0
    %v400 = vpop.f32.mrb[0].mxu0
    %401 = vdwg.mxu0
    %v402 = vmax.f32 %v396, 0.0
    %v403 = vmax.f32 %v398, 0.0
    %v404 = vld [vmem:[%s5] sm:$0x3]
    %v406 = vlaneseq
    %v407 = vshrl.u32 %v406, 7
    %v408 = vsub.s32 0, %v407
    %v409 = vrot.slane %v404, %v408
    %v410 = vlaneseq
    %v411 = vshrl.u32 %v410, 7
    %v412 = vsub.s32 1, %v411
    %v413 = vrot.slane %v404, %v412
    %v416 = vmul.f32 %v402, %v409
    %v417 = vmul.f32 %v403, %v413
    %v418 = vadd.f32 %v416, %v417
    %419 = vadd.xlane.f32.xlu0 %v418
    %v420 = vpop.xlane.xlu0 %419
    %v421 = vld [vmem:[#allocation2] sm:$0x1]
    %v423 = vlaneseq
    %v424 = vshrl.u32 %v423, 7
    %v425 = vsub.s32 0, %v424
    %v426 = vrot.slane %v421, %v425
    %v428 = vadd.f32 %v420, %v426
    %vm429 = vcmask 7168
    %430 = vst.msk [vmem:[%s7] sm:$0xff] %vm429, %v428
    // Predicated region
    $region42: #{tpu_custom_call.1} parent=1 // pred_check
      _
    $region43: #{tpu_custom_call.1} parent=1 // pred_check_branch
      %432 = sbr.rel (0) target = $region45
    $region44: #{tpu_custom_call.1} parent=1 // pred_region
      _
    $region45: #{tpu_custom_call.1} parent=1 // pred_fallthru
      _
    // Predicated region
    $region46: #{tpu_custom_call.1} parent=1 // pred_check
      _
    $region47: #{tpu_custom_call.1} parent=1 // pred_check_branch
      %434 = sbr.rel (0) target = $region49
    $region48: #{tpu_custom_call.1} parent=1 // pred_region
      _
    $region49: #{tpu_custom_call.1} parent=1 // pred_fallthru
      _
    %435 = vsyncpa [#allocation4], 1
    %436 = vsyncpa [#allocation6], 1

</llo_original>
